<compile_context>
chip_gen: v5e
topology: v5e:2x2
jax: 0.10.0
libtpu: 0.0.40
codegen_flags: <defaults>
</compile_context>

<pallas_src>
import functools
import math

import jax
import jax.numpy as jnp
from jax.experimental import pallas as pl
from jax.experimental.pallas import tpu as pltpu


def _round_up(x, m):
    return ((x + m - 1) // m) * m


def _layernorm_kernel(x_ref, scale_ref, shift_ref, o_ref, *, eps, inv_n, bf16_epilogue):
    # x_ref: (tile_rows, emb_dim) VMEM tile. Exact two-pass stats in f32.
    x = x_ref[...].astype(jnp.float32)
    mean = jnp.sum(x, axis=-1, keepdims=True) * inv_n
    xc = x - mean
    # Population variance (matches torch.var(..., unbiased=False)).
    var = jnp.sum(xc * xc, axis=-1, keepdims=True) * inv_n
    inv_std = jax.lax.rsqrt(var + eps)
    if bf16_epilogue:
        # Output is bf16 anyway; doing the affine chain in bf16 halves the f32
        # temp pressure on chips with bf16 VALU (v6e/v7x; v5e just up-converts).
        norm = (xc * inv_std).astype(jnp.bfloat16)
        o_ref[...] = (norm * scale_ref[...] + shift_ref[...]).astype(o_ref.dtype)
    else:
        o_ref[...] = (xc * inv_std * scale_ref[...] + shift_ref[...]).astype(o_ref.dtype)


def _tpu_params():
    """Returns (default vmem_limit_bytes, guessed #TensorCores per chip)."""
    try:
        cap = int(pltpu.get_tpu_info().vmem_capacity_bytes)
    except Exception:
        cap = 64 << 20  # conservative fallback
    # ~96 MiB scoped limit on 128 MiB chips (v5e/v6e), ~48 MiB on v7x (64 MiB).
    vmem_limit = max(32 << 20, (cap * 3) // 4)
    # v7x exposes 64 MiB VMEM per TensorCore and has 2 TCs/chip; v5e/v6e: 128 MiB, 1 TC.
    num_tc = 2 if cap <= (64 << 20) else 1
    return vmem_limit, num_tc


def layer_norm(x, scale, shift, *, eps=1e-5, tile_rows=None, vmem_limit_bytes=None):
    """LayerNorm over the last axis of x, with per-feature scale/shift.

    x: (..., emb_dim); scale, shift: (emb_dim,)
    """
    orig_shape = x.shape
    emb_dim = orig_shape[-1]
    rows = math.prod(orig_shape[:-1]) if len(orig_shape) > 1 else 1

    itemsize = jnp.dtype(x.dtype).itemsize
    # Sublane multiple: 8 for f32, 16 for bf16, 32 for int8/fp8.
    row_mult = max(8, 32 // itemsize)

    default_limit, num_tc = _tpu_params()
    if vmem_limit_bytes is None:
        vmem_limit_bytes = default_limit

    # Per-row VMEM footprint inside the pipeline:
    #   double-buffered input + output tiles : 4 * itemsize * emb
    #   f32 body temporaries (x_f32, xc, epilogue) : ~3 * 4 * emb
    bytes_per_row = emb_dim * (4 * itemsize + 12)
    max_tr = max(row_mult, (vmem_limit_bytes // bytes_per_row) // row_mult * row_mult)

    if rows <= row_mult:
        tr = rows  # single full-extent block along rows (always a legal block dim)
    else:
        if tile_rows is None:
            # Byte-based target: ~8 MiB of input per tile keeps the DMA engine
            # streaming at the HBM roofline regardless of feature width.
            target_bytes = 8 << 20
            tr = _round_up(max(1, target_bytes // (emb_dim * itemsize)), row_mult)
        else:
            tr = _round_up(max(1, int(tile_rows)), row_mult)
        tr = min(tr, max_tr)  # never exceed the VMEM budget (incl. explicit tile_rows)
        # Only on 2-TC chips (v7x): give both TensorCores (roughly) equal work.
        if num_tc > 1 and rows > row_mult * num_tc:
            steps = _round_up(max(pl.cdiv(rows, tr), num_tc), num_tc)
            tr = min(tr, max(row_mult, _round_up(pl.cdiv(rows, steps), row_mult)))
        if tr >= rows:
            tr = rows  # full-extent block along rows

    grid = (pl.cdiv(rows, tr),)

    # bf16 inputs: stats in f32, affine epilogue in bf16; otherwise all f32.
    bf16_epilogue = x.dtype == jnp.bfloat16
    param_dtype = jnp.bfloat16 if bf16_epilogue else jnp.float32

    x2d = x.reshape(rows, emb_dim)
    scale2d = scale.reshape(1, emb_dim).astype(param_dtype)
    shift2d = shift.reshape(1, emb_dim).astype(param_dtype)

    out2d = pl.pallas_call(
        functools.partial(
            _layernorm_kernel,
            eps=float(eps),
            inv_n=1.0 / emb_dim,
            bf16_epilogue=bf16_epilogue,
        ),
        out_shape=jax.ShapeDtypeStruct((rows, emb_dim), x.dtype),
        grid_spec=pltpu.PrefetchScalarGridSpec(
            num_scalar_prefetch=0,
            grid=grid,
            in_specs=[
                pl.BlockSpec((tr, emb_dim), lambda i: (i, 0)),
                # Constant index_map -> scale/shift blocks stay resident in VMEM.
                pl.BlockSpec((1, emb_dim), lambda i: (0, 0)),
                pl.BlockSpec((1, emb_dim), lambda i: (0, 0)),
            ],
            out_specs=pl.BlockSpec((tr, emb_dim), lambda i: (i, 0)),
        ),
        compiler_params=pltpu.CompilerParams(
            dimension_semantics=("parallel",),
            vmem_limit_bytes=int(vmem_limit_bytes),
        ),
    )(x2d, scale2d, shift2d)

    return out2d.reshape(orig_shape)


if __name__ == "__main__":
    batch, seq, emb_dim = 2, 8, 32
    eps = 1e-5

    key = jax.random.PRNGKey(0)
    kx, ks, kb = jax.random.split(key, 3)
    x = jax.random.normal(kx, (batch, seq, emb_dim), dtype=jnp.float32)
    scale = 1.0 + 0.1 * jax.random.normal(ks, (emb_dim,), dtype=jnp.float32)
    shift = 0.1 * jax.random.normal(kb, (emb_dim,), dtype=jnp.float32)

    def ref_ln(xv, sv, bv, e):
        mean = jnp.mean(xv, axis=-1, keepdims=True)
        var = jnp.mean((xv - mean) ** 2, axis=-1, keepdims=True)
        return sv * ((xv - mean) / jnp.sqrt(var + e)) + bv

    # Main check (non-trivial affine params).
    out = jax.block_until_ready(layer_norm(x, scale, shift, eps=eps))
    ref = ref_ln(x, scale, shift, eps)
    assert out.shape == x.shape and out.dtype == x.dtype
    assert jnp.max(jnp.abs(out - ref)) < 1e-5

    # Default-init params (ones / zeros), like the PyTorch module at init.
    ones = jnp.ones((emb_dim,), jnp.float32)
    zeros = jnp.zeros((emb_dim,), jnp.float32)
    out_default = jax.block_until_ready(layer_norm(x, ones, zeros, eps=eps))
    assert jnp.max(jnp.abs(out_default - ref_ln(x, ones, zeros, eps))) < 1e-5

    # Ragged-row / unaligned-feature path: rows=21 (not a tile multiple), emb=96 (<128).
    xr = jax.random.normal(jax.random.PRNGKey(1), (3, 7, 96), dtype=jnp.float32)
    sr = 1.0 + 0.1 * jax.random.normal(jax.random.PRNGKey(2), (96,), dtype=jnp.float32)
    br = 0.1 * jax.random.normal(jax.random.PRNGKey(3), (96,), dtype=jnp.float32)
    out_r = jax.block_until_ready(layer_norm(xr, sr, br, eps=eps, tile_rows=8))
    assert jnp.max(jnp.abs(out_r - ref_ln(xr, sr, br, eps))) < 1e-5

    # bf16 path (bf16 affine epilogue, f32 statistics).
    xb = x.astype(jnp.bfloat16)
    out_b = jax.block_until_ready(layer_norm(xb, scale, shift, eps=eps))
    ref_b = ref_ln(xb.astype(jnp.float32), scale, shift, eps)
    assert out_b.dtype == jnp.bfloat16
    assert jnp.max(jnp.abs(out_b.astype(jnp.float32) - ref_b)) < 0.15

    print("KERNEL_OK")
</pallas_src>

<mosaic_0001>
module attributes {stable_mosaic.version = 11 : i64} {
  func.func @_layernorm_kernel(%arg0: i32, %arg1: memref<16x32xf32, #tpu.memory_space<vmem>>, %arg2: memref<1x32xf32, #tpu.memory_space<vmem>>, %arg3: memref<1x32xf32, #tpu.memory_space<vmem>>, %arg4: memref<16x32xf32, #tpu.memory_space<vmem>>) attributes {dimension_semantics = [#tpu.dimension_semantics<parallel>], iteration_bounds = array<i64: 1>, scalar_prefetch = 0 : i64, scratch_operands = 0 : i64, tpu.core_type = #tpu.core_type<tc>, window_params = [{transform_indices = @transform_0, window_bounds = array<i64: 16, 32>}, {pipeline_mode = #tpu.pipeline_mode<synchronous>, transform_indices = @transform_1, window_bounds = array<i64: 1, 32>}, {pipeline_mode = #tpu.pipeline_mode<synchronous>, transform_indices = @transform_2, window_bounds = array<i64: 1, 32>}, {transform_indices = @transform_3, window_bounds = array<i64: 16, 32>}]} {
    %c0 = arith.constant 0 : index
    %c0_0 = arith.constant 0 : index
    %0 = vector.load %arg1[%c0, %c0_0] : memref<16x32xf32, #tpu.memory_space<vmem>>, vector<16x32xf32>
    %cst = arith.constant dense<0.000000e+00> : vector<16xf32>
    %1 = vector.multi_reduction <add>, %0, %cst [1] : vector<16x32xf32> to vector<16xf32>
    %2 = vector.shape_cast %1 : vector<16xf32> to vector<16x1xf32>
    %cst_1 = arith.constant 3.125000e-02 : f32
    %3 = vector.broadcast %cst_1 : f32 to vector<16x1xf32>
    %4 = arith.mulf %2, %3 : vector<16x1xf32>
    %5 = vector.broadcast %4 : vector<16x1xf32> to vector<16x32xf32>
    %6 = arith.subf %0, %5 : vector<16x32xf32>
    %7 = arith.mulf %6, %6 : vector<16x32xf32>
    %cst_2 = arith.constant dense<0.000000e+00> : vector<16xf32>
    %8 = vector.multi_reduction <add>, %7, %cst_2 [1] : vector<16x32xf32> to vector<16xf32>
    %9 = vector.shape_cast %8 : vector<16xf32> to vector<16x1xf32>
    %cst_3 = arith.constant 3.125000e-02 : f32
    %10 = vector.broadcast %cst_3 : f32 to vector<16x1xf32>
    %11 = arith.mulf %9, %10 : vector<16x1xf32>
    %cst_4 = arith.constant 9.99999974E-6 : f32
    %12 = vector.broadcast %cst_4 : f32 to vector<16x1xf32>
    %13 = arith.addf %11, %12 : vector<16x1xf32>
    %14 = math.rsqrt %13 : vector<16x1xf32>
    %15 = vector.broadcast %14 : vector<16x1xf32> to vector<16x32xf32>
    %16 = arith.mulf %6, %15 : vector<16x32xf32>
    %c0_5 = arith.constant 0 : index
    %c0_6 = arith.constant 0 : index
    %17 = vector.load %arg2[%c0_5, %c0_6] : memref<1x32xf32, #tpu.memory_space<vmem>>, vector<1x32xf32>
    %18 = vector.broadcast %17 : vector<1x32xf32> to vector<16x32xf32>
    %19 = arith.mulf %16, %18 : vector<16x32xf32>
    %c0_7 = arith.constant 0 : index
    %c0_8 = arith.constant 0 : index
    %20 = vector.load %arg3[%c0_7, %c0_8] : memref<1x32xf32, #tpu.memory_space<vmem>>, vector<1x32xf32>
    %21 = vector.broadcast %20 : vector<1x32xf32> to vector<16x32xf32>
    %22 = arith.addf %19, %21 : vector<16x32xf32>
    %c0_9 = arith.constant 0 : index
    %c0_10 = arith.constant 0 : index
    %23 = vector.load %arg4[%c0_9, %c0_10] : memref<16x32xf32, #tpu.memory_space<vmem>>, vector<16x32xf32>
    tpu.vector_store %arg4[%c0_9, %c0_10], %22 {strides = array<i32>} : memref<16x32xf32, #tpu.memory_space<vmem>>, vector<16x32xf32>,
    return
  }
  func.func @transform_0(%arg0: i32) -> (i32, i32) {
    %c0_i32 = arith.constant 0 : i32
    %c0_i32_0 = arith.constant 0 : i32
    return %arg0, %c0_i32 : i32, i32
  }
  func.func @transform_1(%arg0: i32) -> (i32, i32) {
    %c0_i32 = arith.constant 0 : i32
    %c0_i32_0 = arith.constant 0 : i32
    %c0_i32_1 = arith.constant 0 : i32
    return %c0_i32, %c0_i32_0 : i32, i32
  }
  func.func @transform_2(%arg0: i32) -> (i32, i32) {
    %c0_i32 = arith.constant 0 : i32
    %c0_i32_0 = arith.constant 0 : i32
    %c0_i32_1 = arith.constant 0 : i32
    return %c0_i32, %c0_i32_0 : i32, i32
  }
  func.func @transform_3(%arg0: i32) -> (i32, i32) {
    %c0_i32 = arith.constant 0 : i32
    %c0_i32_0 = arith.constant 0 : i32
    return %arg0, %c0_i32 : i32, i32
  }
}

</mosaic_0001>

<llo_original>
// kernel: tpu_custom_call.1
$region0: #{tpu_custom_call.1}
  #allocation0 [shape = 'u32[]', space=smem, size = 0x4, offset = 0x4, fixed_abs, tag = 'smem constant byte address 0x4 - core index']
  #allocation1 [shape = 'u32[72,128]{1,0:T(1,128)}', space=vmem, size = 0x9000, scoped, tag = 'internal scratch']
  %s0 = inlined_call_operand.hbm [shape: f32[16,32], index: 0, kind: input, shape index: {}]
  %s1 = inlined_call_operand.hbm [shape: f32[1,32], index: 1, kind: input, shape index: {}]
  %s2 = inlined_call_operand.vmem [shape: f32[1,32], index: 2, kind: input, shape index: {}]
  %s3 = inlined_call_operand.hbm [shape: f32[16,32], index: 3, kind: output, shape index: {}]
  %s4 = sld [smem:[#allocation0]]
  $region30: #{tpu_custom_call.1} parent=0
    _
  %s6 = ssub.s32 1, %s4
  %s7 = scalar_select 0, %s6, %s4
  $region1: #{tpu_custom_call.1} parent=0
    #allocation2 [shape = 'u8[8192]{0}', space=vmem, size = 0x2000, scoped, tag = 'input window, operand 0, single buffered']
    #allocation3 [shape = 's32[1]{0}', space=sflag, size = 0x4, scoped, tag = 'scoped memory for tpu_custom_call.1']
    #allocation4 [shape = 's32[1]{0}', space=sflag, size = 0x4, scoped, tag = 'scoped memory for tpu_custom_call.1']
    #allocation5 [shape = 'u8[512]{0}', space=vmem, size = 0x400, scoped, tag = 'input window, operand 1, single buffered']
    #allocation6 [shape = 's32[1]{0}', space=sflag, size = 0x4, scoped, tag = 'scoped memory for tpu_custom_call.1']
    #allocation7 [shape = 'u8[8192]{0}', space=vmem, size = 0x2000, scoped, tag = 'output window, operand 0, single buffered']
    %8 = vsyncpa [#allocation3], 0
    %9 = vsyncpa [#allocation6], 0
    %10 = vsyncpa [#allocation4], 0
    // Predicated region
    $region2: #{tpu_custom_call.1} parent=1 // pred_check
      _
    $region3: #{tpu_custom_call.1} parent=1 // pred_check_branch
      %12 = sbr.rel (0) target = $region5
    $region4: #{tpu_custom_call.1} parent=1 // pred_region
      %14 = vsyncadd [#allocation3], 0
      %s15 = sshll.u32 %s0, 4
      %s16 = int_to_ptr.hbm [resolvable:$true] %s15
      %s17 = sshll.u32 [#allocation2], 4
      %s18 = int_to_ptr.vmem [resolvable:$true] %s17
      %23 = dma.hbm_to_vmem [thread:$0]  %s16, 256, %s18, [#allocation3], 128, 128, 8
    $region5: #{tpu_custom_call.1} parent=1 // pred_fallthru
      _
    // Predicated region
    $region6: #{tpu_custom_call.1} parent=1 // pred_check
      _
    $region7: #{tpu_custom_call.1} parent=1 // pred_check_branch
      %25 = sbr.rel (0) target = $region9
    $region8: #{tpu_custom_call.1} parent=1 // pred_region
      %27 = vsyncadd [#allocation6], 0
      %s29 = sshll.u32 %s1, 4
      %s30 = int_to_ptr.hbm [resolvable:$true] %s29
      %s31 = sshll.u32 [#allocation5], 4
      %s32 = int_to_ptr.vmem [resolvable:$true] %s31
      %34 = dma.hbm_to_vmem [thread:$0]  %s30, 16, %s32, [#allocation6]
    $region9: #{tpu_custom_call.1} parent=1 // pred_fallthru
      _
    // Predicated region
    $region10: #{tpu_custom_call.1} parent=1 // pred_check
      _
    $region11: #{tpu_custom_call.1} parent=1 // pred_check_branch
      %36 = sbr.rel (0) target = $region13
    $region12: #{tpu_custom_call.1} parent=1 // pred_region
      _
    $region13: #{tpu_custom_call.1} parent=1 // pred_fallthru
      _
    // Predicated region
    $region14: #{tpu_custom_call.1} parent=1 // pred_check
      _
    $region15: #{tpu_custom_call.1} parent=1 // pred_check_branch
      %38 = sbr.rel (0) target = $region17
    $region16: #{tpu_custom_call.1} parent=1 // pred_region
      %40 = dma.done [#allocation3], 256
    $region17: #{tpu_custom_call.1} parent=1 // pred_fallthru
      _
    // Predicated region
    $region18: #{tpu_custom_call.1} parent=1 // pred_check
      _
    $region19: #{tpu_custom_call.1} parent=1 // pred_check_branch
      %42 = sbr.rel (0) target = $region21
    $region20: #{tpu_custom_call.1} parent=1 // pred_region
      %44 = dma.done [#allocation6], 16
    $region21: #{tpu_custom_call.1} parent=1 // pred_fallthru
      _
    %v45 = vld [vmem:[#allocation2] sm:$0xff]
    %v46 = vld [vmem:[#allocation2 + $0x8] sm:$0xff]
    %vm47 = vcmask 261120
    %v48 = vsel %vm47, %v45, 0.0
    %49 = vadd.xlane.f32.xlu0 %v48
    %v50 = vpop.xlane.xlu0 %49
    %v51 = vsel %vm47, %v46, 0.0
    %52 = vadd.xlane.f32.xlu0 %v51
    %v53 = vpop.xlane.xlu0 %52
    %v54 = vmul.f32 %v50, 0.03125
    %v55 = vmul.f32 %v53, 0.03125
    %v56 = vsub.f32 %v45, %v54
    %v57 = vsub.f32 %v46, %v55
    %v58 = vmul.f32 %v56, %v56
    %v59 = vmul.f32 %v57, %v57
    %v60 = vsel %vm47, %v58, 0.0
    %61 = vadd.xlane.f32.xlu0 %v60
    %v62 = vpop.xlane.xlu0 %61
    %v63 = vsel %vm47, %v59, 0.0
    %64 = vadd.xlane.f32.xlu0 %v63
    %v65 = vpop.xlane.xlu0 %64
    %v66 = vmul.f32 %v62, 0.03125
    %v67 = vmul.f32 %v65, 0.03125
    %v68 = vadd.f32 %v66, 1e-05
    %v69 = vadd.f32 %v67, 1e-05
    %v70 = vrsqrt.pop %v68
    %v71 = vmul.f32 %v70, %v68
    %v72 = vmul.f32 %v71, %v70
    %v73 = vmul.f32 0.5, %v72
    %v74 = vsub.f32 1.5, %v73
    %v75 = vmul.f32 %v70, %v74
    %vm76 = vweird.f32 %v68
    %vm77 = vweird.f32 %v70
    %vm78 = vmor %vm76, %vm77
    %v79 = vsel %vm78, %v70, %v75
    %v80 = vrsqrt.pop %v69
    %v81 = vmul.f32 %v80, %v69
    %v82 = vmul.f32 %v81, %v80
    %v83 = vmul.f32 0.5, %v82
    %v84 = vsub.f32 1.5, %v83
    %v85 = vmul.f32 %v80, %v84
    %vm86 = vweird.f32 %v69
    %vm87 = vweird.f32 %v80
    %vm88 = vmor %vm86, %vm87
    %v89 = vsel %vm88, %v80, %v85
    %v90 = vmul.f32 %v56, %v79
    %v91 = vmul.f32 %v57, %v89
    %v92 = vld [vmem:[#allocation5] sm:$0x1]
    %v94 = vperm.slane %v92, 0
    %v96 = vmul.f32 %v90, %v94
    %v97 = vmul.f32 %v91, %v94
    %v98 = vld [vmem:[%s2] sm:$0x1]
    %v100 = vperm.slane %v98, 0
    %v102 = vadd.f32 %v96, %v100
    %v103 = vadd.f32 %v97, %v100
    %104 = vst.msk [vmem:[#allocation7] sm:$0xff] %vm47, %v102
    %105 = vst.msk [vmem:[#allocation7 + $0x8] sm:$0xff] %vm47, %v103
    // Predicated region
    $region22: #{tpu_custom_call.1} parent=1 // pred_check
      _
    $region23: #{tpu_custom_call.1} parent=1 // pred_check_branch
      %107 = sbr.rel (0) target = $region25
    $region24: #{tpu_custom_call.1} parent=1 // pred_region
      %109 = vsyncadd [#allocation4], 0
      %s110 = sshll.u32 [#allocation7], 4
      %s111 = int_to_ptr.vmem [resolvable:$true] %s110
      %s112 = sshll.u32 %s3, 4
      %s113 = int_to_ptr.hbm [resolvable:$true] %s112
      %118 = dma.vmem_to_hbm [thread:$0]  %s111, 256, %s113, [#allocation4], 128, 128, 8
    $region25: #{tpu_custom_call.1} parent=1 // pred_fallthru
      _
    // Predicated region
    $region26: #{tpu_custom_call.1} parent=1 // pred_check
      _
    $region27: #{tpu_custom_call.1} parent=1 // pred_check_branch
      %120 = sbr.rel (0) target = $region29
    $region28: #{tpu_custom_call.1} parent=1 // pred_region
      %122 = dma.done [#allocation4], 256
    $region29: #{tpu_custom_call.1} parent=1 // pred_fallthru
      _
    %123 = vsyncpa [#allocation3], 1
    %124 = vsyncpa [#allocation6], 1
    %125 = vsyncpa [#allocation4], 1

</llo_original>
